<compile_context>
chip_gen: v6e
topology: v6e:2x2x1
jax: 0.10.0
libtpu: 0.0.40
codegen_flags: <defaults>
</compile_context>

<pallas_src>
import functools

import jax
import jax.numpy as jnp
from jax.experimental import pallas as pl
from jax.experimental.pallas import tpu as pltpu


def _bce_partial_kernel(pred_ref, tgt_ref, out_ref, *, anchors, total_cols):
    """One grid step of lane-dense BCE-with-logits partial sums.

    pred_ref: (C, TILE) logits in the input dtype; classes on sublanes,
              flattened batch*anchor columns on lanes.
    tgt_ref : (1, TILE) int32 class index per column.
    out_ref : (1, TILE) f32 per-column loss summed over classes (masked cols -> 0).
    """
    i = pl.program_id(0)
    x = pred_ref[...].astype(jnp.float32)          # cast in-kernel; narrow dtype streamed from HBM
    t = tgt_ref[...]                               # (1, TILE) int32
    c, tile = x.shape

    # Global flattened (batch*anchor) column index of each lane in this tile.
    col = i * tile + jax.lax.broadcasted_iota(jnp.int32, (1, tile), 1)
    # In-kernel replacement for the wrapper-side predicted[:, :-1] / one_hot[:, :-1] slices:
    # drop the last anchor of every batch row, and any out-of-range padded columns.
    valid = (col < total_cols) & ((col % anchors) != (anchors - 1))     # (1, TILE)

    # one_hot(target) built on the sublane (class) axis: iota_c == target (broadcast over sublanes).
    one_hot = (jax.lax.broadcasted_iota(jnp.int32, (c, tile), 0) == t).astype(jnp.float32)

    # Numerically stable BCE with logits (weight is None in the module):
    #   l = max(x, 0) - x*t + log1p(exp(-|x|))
    loss = jnp.maximum(x, 0.0) - x * one_hot + jnp.log1p(jnp.exp(-jnp.abs(x)))
    loss = jnp.where(valid, loss, 0.0)             # select (not multiply) so garbage/pad can't NaN

    # Small sublane reduce (C -> 1) per step; the big lane reduce happens once outside the grid.
    out_ref[...] = jnp.sum(loss, axis=0, keepdims=True)


def binary_cross_entropy_loss(predicted, target, num_labels, *, tile_cols=512):
    """predicted: (B, anchors, num_labels+1) f32/bf16; target: (B, anchors) int. Returns scalar f32."""
    b, a, c = predicted.shape
    assert c == num_labels + 1, "module assumes classes == num_labels + 1"
    assert target.shape == (b, a), "module assumes boxes == anchors"

    n = b * a
    # Lane-dense layout: classes on sublanes, flattened batch*anchor columns on lanes.
    # (One transpose of `predicted`; worth it for small class counts where the natural
    #  layout would waste up to 96% of every vreg/EUP op.)
    pred_t = predicted.reshape(n, c).T               # (C, N), input dtype kept (no upcast)
    tgt_t = target.reshape(1, n).astype(jnp.int32)   # (1, N)

    if n % 128 == 0:
        tile = min(tile_cols, n)                     # lane-dense multiple-of-128 tile
    else:
        tile = n                                     # small / odd N: single full-width block
    grid = pl.cdiv(n, tile)

    kernel = functools.partial(_bce_partial_kernel, anchors=a, total_cols=n)
    itemsize = jnp.dtype(pred_t.dtype).itemsize

    partials = pl.pallas_call(
        kernel,
        out_shape=jax.ShapeDtypeStruct((1, grid * tile), jnp.float32),
        grid=(grid,),
        in_specs=[
            pl.BlockSpec((c, tile), lambda i: (0, i)),   # logits tile (classes x columns)
            pl.BlockSpec((1, tile), lambda i: (0, i)),   # target indices for those columns
        ],
        out_specs=pl.BlockSpec((1, tile), lambda i: (0, i)),  # lane-dense partial-sum row
        compiler_params=pltpu.CompilerParams(
            dimension_semantics=("parallel",),           # no carried state -> both v7x TCs usable
            vmem_limit_bytes=32 * 1024 * 1024,           # fits v5e/v6e/v7x scoped VMEM with headroom
        ),
        cost_estimate=pl.CostEstimate(
            flops=6 * n * c,
            transcendentals=2 * n * c,
            bytes_accessed=n * c * itemsize + n * 4 + grid * tile * 4,
        ),
    )(pred_t, tgt_t)

    # Single big reduction + scale outside the grid (accuracy + keeps XLU out of the hot loop).
    return jnp.sum(partials) / jnp.float32(num_labels)


def _reference(predicted, target, num_labels):
    # Pure-JAX reference mirroring the PyTorch module.
    one_hot = jnp.eye(num_labels + 1, dtype=jnp.float32)[target]
    one_hot = one_hot[:, :-1]
    x = predicted[:, :-1].astype(jnp.float32)
    loss = jnp.maximum(x, 0.0) - x * one_hot + jnp.log1p(jnp.exp(-jnp.abs(x)))
    return jnp.sum(loss) / num_labels


if __name__ == "__main__":
    num_labels = 4                        # classes = num_labels + 1 (incl. background)
    batch, anchors = 2, 256               # boxes == anchors; N = 512 -> 4 grid steps at tile=128

    key = jax.random.PRNGKey(0)
    k_pred, k_tgt = jax.random.split(key)
    predicted = jax.random.normal(k_pred, (batch, anchors, num_labels + 1), dtype=jnp.float32)
    target = jax.random.randint(k_tgt, (batch, anchors), 0, num_labels + 1, dtype=jnp.int32)

    bce = jax.jit(binary_cross_entropy_loss, static_argnames=("num_labels", "tile_cols"))
    out = bce(predicted, target, num_labels=num_labels, tile_cols=128)
    out = jax.block_until_ready(out)

    ref = jax.block_until_ready(_reference(predicted, target, num_labels))
    assert jnp.allclose(out, ref, rtol=1e-4, atol=1e-4), (out, ref)

    print("KERNEL_OK")
</pallas_src>

<mosaic_0001>
module attributes {stable_mosaic.version = 11 : i64} {
  func.func @_bce_partial_kernel(%arg0: i32, %arg1: memref<5x128xf32, #tpu.memory_space<vmem>>, %arg2: memref<1x128xi32, #tpu.memory_space<vmem>>, %arg3: memref<1x128xf32, #tpu.memory_space<vmem>>) attributes {dimension_semantics = [#tpu.dimension_semantics<parallel>], iteration_bounds = array<i64: 4>, scalar_prefetch = 0 : i64, scratch_operands = 0 : i64, tpu.core_type = #tpu.core_type<tc>, window_params = [{transform_indices = @transform_0, window_bounds = array<i64: 5, 128>}, {transform_indices = @transform_1, window_bounds = array<i64: 1, 128>}, {transform_indices = @transform_2, window_bounds = array<i64: 1, 128>}]} {
    %c0 = arith.constant 0 : index
    %c0_0 = arith.constant 0 : index
    %0 = vector.load %arg1[%c0, %c0_0] : memref<5x128xf32, #tpu.memory_space<vmem>>, vector<5x128xf32>
    %c0_1 = arith.constant 0 : index
    %c0_2 = arith.constant 0 : index
    %1 = vector.load %arg2[%c0_1, %c0_2] : memref<1x128xi32, #tpu.memory_space<vmem>>, vector<1x128xi32>
    %c128_i32 = arith.constant 128 : i32
    %2 = arith.muli %arg0, %c128_i32 : i32
    %3 = tpu.iota {dimensions = array<i32: 1>} : vector<1x128xi32>
    %4 = vector.broadcast %2 : i32 to vector<1x128xi32>
    %5 = arith.addi %4, %3 : vector<1x128xi32>
    %c512_i32 = arith.constant 512 : i32
    %6 = vector.broadcast %c512_i32 : i32 to vector<1x128xi32>
    %7 = arith.cmpi slt, %5, %6 : vector<1x128xi32>
    %c256_i32 = arith.constant 256 : i32
    %c0_i32 = arith.constant 0 : i32
    %8 = arith.cmpi eq, %c256_i32, %c0_i32 : i32
    %c1_i32 = arith.constant 1 : i32
    %9 = arith.select %8, %c1_i32, %c256_i32 : i32
    %10 = vector.broadcast %9 : i32 to vector<1x128xi32>
    %11 = arith.remsi %5, %10 : vector<1x128xi32>
    %c0_i32_3 = arith.constant 0 : i32
    %12 = vector.broadcast %c0_i32_3 : i32 to vector<1x128xi32>
    %13 = arith.cmpi ne, %11, %12 : vector<1x128xi32>
    %c0_i32_4 = arith.constant 0 : i32
    %14 = vector.broadcast %c0_i32_4 : i32 to vector<1x128xi32>
    %15 = arith.cmpi slt, %11, %14 : vector<1x128xi32>
    %c0_i32_5 = arith.constant 0 : i32
    %16 = arith.cmpi slt, %9, %c0_i32_5 : i32
    %17 = vector.broadcast %16 : i1 to vector<1x128xi1>
    %18 = vector.broadcast %17 : vector<1x128xi1> to vector<1x128xi1>
    %19 = arith.xori %15, %18 : vector<1x128xi1>
    %20 = arith.andi %19, %13 : vector<1x128xi1>
    %21 = vector.broadcast %9 : i32 to vector<1x128xi32>
    %22 = arith.addi %11, %21 : vector<1x128xi32>
    %23 = arith.select %20, %22, %11 : vector<1x128xi1>, vector<1x128xi32>
    %c255_i32 = arith.constant 255 : i32
    %24 = vector.broadcast %c255_i32 : i32 to vector<1x128xi32>
    %25 = arith.cmpi ne, %23, %24 : vector<1x128xi32>
    %26 = arith.andi %7, %25 : vector<1x128xi1>
    %27 = tpu.iota {dimensions = array<i32: 0>} : vector<5x128xi32>
    %28 = vector.broadcast %1 : vector<1x128xi32> to vector<5x128xi32>
    %29 = arith.cmpi eq, %27, %28 : vector<5x128xi32>
    %30 = arith.extui %29 : vector<5x128xi1> to vector<5x128xi32>
    %31 = arith.sitofp %30 : vector<5x128xi32> to vector<5x128xf32>
    %cst = arith.constant 0.000000e+00 : f32
    %32 = vector.broadcast %cst : f32 to vector<5x128xf32>
    %33 = arith.maximumf %0, %32 : vector<5x128xf32>
    %34 = arith.mulf %0, %31 : vector<5x128xf32>
    %35 = arith.subf %33, %34 : vector<5x128xf32>
    %36 = math.absf %0 : vector<5x128xf32>
    %cst_6 = arith.constant 0.000000e+00 : f32
    %37 = vector.broadcast %cst_6 : f32 to vector<5x128xf32>
    %38 = arith.subf %37, %36 : vector<5x128xf32>
    %39 = math.exp %38 : vector<5x128xf32>
    %40 = math.log1p %39 : vector<5x128xf32>
    %41 = arith.addf %35, %40 : vector<5x128xf32>
    %cst_7 = arith.constant 0.000000e+00 : f32
    %42 = vector.shape_cast %26 : vector<1x128xi1> to vector<1x128xi1>
    %43 = vector.broadcast %42 : vector<1x128xi1> to vector<5x128xi1>
    %44 = vector.broadcast %cst_7 : f32 to vector<5x128xf32>
    %45 = arith.select %43, %41, %44 : vector<5x128xi1>, vector<5x128xf32>
    %cst_8 = arith.constant dense<0.000000e+00> : vector<128xf32>
    %46 = vector.multi_reduction <add>, %45, %cst_8 [0] : vector<5x128xf32> to vector<128xf32>
    %47 = vector.shape_cast %46 : vector<128xf32> to vector<1x128xf32>
    %c0_9 = arith.constant 0 : index
    %c0_10 = arith.constant 0 : index
    %48 = vector.load %arg3[%c0_9, %c0_10] : memref<1x128xf32, #tpu.memory_space<vmem>>, vector<1x128xf32>
    tpu.vector_store %arg3[%c0_9, %c0_10], %47 {strides = array<i32>} : memref<1x128xf32, #tpu.memory_space<vmem>>, vector<1x128xf32>,
    return
  }
  func.func @transform_0(%arg0: i32) -> (i32, i32) {
    %c0_i32 = arith.constant 0 : i32
    %c0_i32_0 = arith.constant 0 : i32
    return %c0_i32, %arg0 : i32, i32
  }
  func.func @transform_1(%arg0: i32) -> (i32, i32) {
    %c0_i32 = arith.constant 0 : i32
    %c0_i32_0 = arith.constant 0 : i32
    return %c0_i32, %arg0 : i32, i32
  }
  func.func @transform_2(%arg0: i32) -> (i32, i32) {
    %c0_i32 = arith.constant 0 : i32
    %c0_i32_0 = arith.constant 0 : i32
    return %c0_i32, %arg0 : i32, i32
  }
}

</mosaic_0001>

<llo_original>
// kernel: binary_cross_entropy_loss.1
$region0: #{binary_cross_entropy_loss.1}
  #allocation0 [shape = 'u32[]', space=smem, size = 0x4, offset = 0x4, fixed_abs, tag = 'smem constant byte address 0x4 - core index']
  #allocation1 [shape = 'u32[144,128]{1,0:T(1,128)}', space=vmem, size = 0x12000, scoped, tag = 'internal scratch']
  %s0 = inlined_call_operand.vmem [shape: f32[5,512], index: 0, kind: input, shape index: {}]
  %s1 = inlined_call_operand.vmem [shape: s32[1,512], index: 1, kind: input, shape index: {}]
  %s2 = inlined_call_operand.vmem [shape: f32[1,512], index: 2, kind: output, shape index: {}]
  %s3 = sld [smem:[#allocation0]]
  $region41: #{binary_cross_entropy_loss.1} parent=0
    _
  %s5 = ssub.s32 1, %s3
  %s6 = scalar_select 0, %s5, %s3
  loop: start=0, step=1, limit=6
  $region2: #{binary_cross_entropy_loss.1} parent=0 // loop_pre_header
    _
  $region3: #{binary_cross_entropy_loss.1} parent=0 // loop_header
    %s8 = sphi 0, %s12
    %p9 = scmp.ge.s32.totalorder %s8, 6
    %s18 = sphi 0, %s20
    %s21 = sphi 0, %s18
    %s22 = sphi 0, %s21
    %s38 = sphi 0, %s22
    %s44 = sphi 0, %s46
    %s47 = sphi 0, %s44
    %s48 = sphi 0, %s47
    %s64 = sphi 0, %s48
    %s70 = sphi 0, %s72
    %s73 = sphi 0, %s70
    %s74 = sphi 0, %s73
    %s90 = sphi 0, %s74
  $region4: #{binary_cross_entropy_loss.1} parent=0 // loop_header_branch
    %11 = sbr.rel (%p9) target = $region8
  $region5: #{binary_cross_entropy_loss.1} parent=0 // loop_body
    %s13 = ssub.s32 %s8, 1
    %s14 = ssub.s32 %s8, 2
    %s15 = sadd.s32 %s8, 1
    %s16 = ssub.s32 %s8, %s15
    %p17 = scmp.eq.s32.totalorder %s16, 0
    %s19 = sadd.s32 %s18, 1
    %s20 = scalar_select %p17, %s18, %s19
    %p23 = pneg %p17
    %p24 = scmp.eq.s32.totalorder %s8, 3
    %p25 = por %p23, %p24
    %p26 = scmp.ne.s32.totalorder %s18, %s21
    %p27 = scmp.eq.s32.totalorder %s8, 0
    %p28 = por %p26, %p27
    %p29 = scmp.ne.s32.totalorder %s18, %s21
    %p30 = scmp.eq.s32.totalorder %s13, 3
    %p31 = por %p29, %p30
    %p32 = scmp.ne.s32.totalorder %s21, %s22
    %p33 = scmp.eq.s32.totalorder %s13, 0
    %p34 = por %p32, %p33
    %p35 = scmp.ne.s32.totalorder %s21, %s22
    %p36 = scmp.eq.s32.totalorder %s14, 3
    %p37 = por %p35, %p36
    %p39 = scmp.ne.s32.totalorder %s22, %s38
    %p40 = scmp.eq.s32.totalorder %s14, 0
    %p41 = por %p39, %p40
    %s42 = ssub.s32 %s8, %s15
    %p43 = scmp.eq.s32.totalorder %s42, 0
    %s45 = sadd.s32 %s44, 1
    %s46 = scalar_select %p43, %s44, %s45
    %p49 = pneg %p43
    %p50 = scmp.eq.s32.totalorder %s8, 3
    %p51 = por %p49, %p50
    %p52 = scmp.ne.s32.totalorder %s44, %s47
    %p53 = scmp.eq.s32.totalorder %s8, 0
    %p54 = por %p52, %p53
    %p55 = scmp.ne.s32.totalorder %s44, %s47
    %p56 = scmp.eq.s32.totalorder %s13, 3
    %p57 = por %p55, %p56
    %p58 = scmp.ne.s32.totalorder %s47, %s48
    %p59 = scmp.eq.s32.totalorder %s13, 0
    %p60 = por %p58, %p59
    %p61 = scmp.ne.s32.totalorder %s47, %s48
    %p62 = scmp.eq.s32.totalorder %s14, 3
    %p63 = por %p61, %p62
    %p65 = scmp.ne.s32.totalorder %s48, %s64
    %p66 = scmp.eq.s32.totalorder %s14, 0
    %p67 = por %p65, %p66
    %s68 = ssub.s32 %s8, %s15
    %p69 = scmp.eq.s32.totalorder %s68, 0
    %s71 = sadd.s32 %s70, 1
    %s72 = scalar_select %p69, %s70, %s71
    %p75 = pneg %p69
    %p76 = scmp.eq.s32.totalorder %s8, 3
    %p77 = por %p75, %p76
    %p78 = scmp.ne.s32.totalorder %s70, %s73
    %p79 = scmp.eq.s32.totalorder %s8, 0
    %p80 = por %p78, %p79
    %p81 = scmp.ne.s32.totalorder %s70, %s73
    %p82 = scmp.eq.s32.totalorder %s13, 3
    %p83 = por %p81, %p82
    %p84 = scmp.ne.s32.totalorder %s73, %s74
    %p85 = scmp.eq.s32.totalorder %s13, 0
    %p86 = por %p84, %p85
    %p87 = scmp.ne.s32.totalorder %s73, %s74
    %p88 = scmp.eq.s32.totalorder %s14, 3
    %p89 = por %p87, %p88
    %p91 = scmp.ne.s32.totalorder %s74, %s90
    %p92 = scmp.eq.s32.totalorder %s14, 0
    %p93 = por %p91, %p92
    %p94 = scmp.le.s32.totalorder 1, %s8
    %p95 = scmp.lt.s32.totalorder %s8, 5
    %p96 = pnand %p94, %p95
    %p97 = pneg %p96
    // Predicated region
    $region9: #{binary_cross_entropy_loss.1} parent=5 // pred_check
      _
    $region10: #{binary_cross_entropy_loss.1} parent=5 // pred_check_branch
      %99 = sbr.rel (%p96) target = $region12
    $region11: #{binary_cross_entropy_loss.1} parent=5 // pred_region
      %s100 = ssub.s32 %s8, 1
    $region12: #{binary_cross_entropy_loss.1} parent=5 // pred_fallthru
      _
    %p101 = scmp.lt.s32.totalorder %s8, 4
    // Predicated region
    $region13: #{binary_cross_entropy_loss.1} parent=5 // pred_check
      %p102 = pneg %p101
    $region14: #{binary_cross_entropy_loss.1} parent=5 // pred_check_branch
      %104 = sbr.rel (%p102) target = $region16
    $region15: #{binary_cross_entropy_loss.1} parent=5 // pred_region
      // Predicated region
      $region17: #{binary_cross_entropy_loss.1} parent=15 // pred_check
        %p105 = pneg %p28
      $region18: #{binary_cross_entropy_loss.1} parent=15 // pred_check_branch
        %107 = sbr.rel (%p105) target = $region20
      $region19: #{binary_cross_entropy_loss.1} parent=15 // pred_region
        %p108 = scmp.lt.s32.totalorder %s8, 3
        %s109 = scalar_select %p108, %s8, 3
        %s110 = smul.addr %s109, 8
        %s111 = scalar_lea.vmem %s0, %s110
      $region20: #{binary_cross_entropy_loss.1} parent=15 // pred_fallthru
        _
      // Predicated region
      $region21: #{binary_cross_entropy_loss.1} parent=15 // pred_check
        %p112 = pneg %p54
      $region22: #{binary_cross_entropy_loss.1} parent=15 // pred_check_branch
        %114 = sbr.rel (%p112) target = $region24
      $region23: #{binary_cross_entropy_loss.1} parent=15 // pred_region
        %p115 = scmp.lt.s32.totalorder %s8, 3
        %s116 = scalar_select %p115, %s8, 3
        %s117 = scalar_lea.vmem %s1, %s116
      $region24: #{binary_cross_entropy_loss.1} parent=15 // pred_fallthru
        _
    $region16: #{binary_cross_entropy_loss.1} parent=5 // pred_fallthru
      _
    %p118 = scmp.le.s32.totalorder 1, %s8
    %p119 = scmp.lt.s32.totalorder %s8, 5
    %p120 = pnand %p118, %p119
    %p121 = pneg %p120
    // Predicated region
    $region25: #{binary_cross_entropy_loss.1} parent=5 // pred_check
      _
    $region26: #{binary_cross_entropy_loss.1} parent=5 // pred_check_branch
      %123 = sbr.rel (%p120) target = $region28
    $region27: #{binary_cross_entropy_loss.1} parent=5 // pred_region
      %s124 = ssub.s32 %s8, 1
      %p125 = scmp.lt.s32.totalorder %s13, 3
      %s126 = scalar_select %p125, %s13, 3
      %s127 = smul.addr %s126, 8
      %s128 = scalar_lea.vmem %s0, %s127
      %p129 = pneg %p34
      %p130 = pneg %p31
      %p131 = scmp.lt.s32.totalorder %s13, 3
      %s132 = scalar_select %p131, %s13, 3
      %s133 = scalar_lea.vmem %s1, %s132
      %p134 = pneg %p60
      %p135 = pneg %p57
      %p136 = pneg %p86
      %p137 = pneg %p83
      %p138 = scmp.lt.s32.totalorder %s13, 3
      %s139 = scalar_select %p138, %s13, 3
      %s140 = scalar_lea.vmem %s2, %s139
      %p141 = scmp.lt.s32.totalorder %s13, 3
      %s142 = scalar_select %p141, %s13, 3
      %s143 = smul.addr %s142, 8
      %s144 = scalar_lea.vmem %s0, %s143
      %p145 = scmp.lt.s32.totalorder %s13, 3
      %s146 = scalar_select %p145, %s13, 3
      %s147 = scalar_lea.vmem %s1, %s146
      %p148 = scmp.lt.s32.totalorder %s13, 3
      %s149 = scalar_select %p148, %s13, 3
      %s150 = scalar_lea.vmem %s2, %s149
      %v151 = vld [vmem:[%s144] sm:$0x1f]
      %v152 = vld [vmem:[%s147] sm:$0x1]
      %s153 = smul.u32 %s13, 128
      %v154 = vlaneseq
      %v155 = vand.u32 %v154, 127
      %v156 = vstv %s153
      %v157 = vadd.s32 %v156, %v155
      %vm158 = vcmp.lt.s32.totalorder %v157, 512
      %vm159 = vcmp.lt.s32.totalorder %v157, 0
      %v160 = vsub.s32 0, %v157
      %v161 = vsel %vm159, %v160, %v157
      %v162 = vshrl.u32 %v161, 8
      %v163 = vand.u32 %v161, 255
      %v164 = vsub.s32 0, %v163
      %v165 = vsel %vm159, %v164, %v163
      %vm166 = vcmp.ne.s32.totalorder %v165, 0
      %vm167 = vcmp.lt.s32.totalorder %v165, 0
      %vm168 = vmand %vm167, %vm166
      %v169 = vadd.s32 %v165, 256
      %v170 = vsel %vm168, %v169, %v165
      %vm171 = vcmp.ne.s32.totalorder %v170, 255
      %vm172 = vmand %vm158, %vm171
      %v173 = vlaneseq
      %v174 = vshrl.u32 %v173, 7
      %v175 = vlaneseq
      %v176 = vshrl.u32 %v175, 7
      %v177 = vsub.s32 0, %v176
      %v178 = vrot.slane %v152, %v177
      %vm179 = vcmp.eq.s32.totalorder %v174, %v178
      %v180 = vsel %vm179, 1, 0
      %v181 = vcvt.s32.f32 %v180
      %v182 = vmax.f32 %v151, 0.0
      %v183 = vmul.f32 %v151, %v181
      %v184 = vsub.f32 %v182, %v183
      %v185 = vand.u32 2147483647, %v151
      %v186 = vsub.f32 0.0, %v185
      %v187 = vmul.f32 %v186, 1.442695
      %v188 = vpow.pop %v187
      %v189 = vadd.f32 %v188, 1.0
      %v190 = vlog2.pop %v189
      %v191 = vmul.f32 %v190, 0.6931472
      %v192 = vmul.f32 -0.5, %v188
      %v193 = vadd.f32 %v192, 1.0
      %v194 = vmul.f32 %v193, %v188
      %v195 = vand.u32 2147483647, %v188
      %vm196 = vcmp.lt.f32.partialorder %v195, 0.0004427343
      %v197 = vsel %vm196, %v194, %v191
      %v198 = vadd.f32 %v184, %v197
      %v199 = vsel %vm172, 1, 0
      %vm200 = vcmp.eq.s32.totalorder %v199, 1
      %v201 = vsel %vm200, %v198, 0.0
      %vm202 = vcmask 1044480
      %v203 = vsel %vm202, %v201, 0.0
      %v204 = vrot.slane %v203, 4
      %v205 = vadd.f32 %v203, %v204
      %v206 = vrot.slane %v205, 2
      %v207 = vadd.f32 %v205, %v206
      %v208 = vrot.slane %v207, 1
      %v209 = vadd.f32 %v207, %v208
      %210 = vst [vmem:[%s150] sm:$0x1] %v209
      %p211 = scmp.lt.s32.totalorder %s13, 3
      %s212 = scalar_select %p211, %s13, 3
      %s213 = scalar_lea.vmem %s2, %s212
      // Predicated region
      $region29: #{binary_cross_entropy_loss.1} parent=27 // pred_check
        %p214 = pneg %p83
      $region30: #{binary_cross_entropy_loss.1} parent=27 // pred_check_branch
        %216 = sbr.rel (%p214) target = $region32
      $region31: #{binary_cross_entropy_loss.1} parent=27 // pred_region
        _
      $region32: #{binary_cross_entropy_loss.1} parent=27 // pred_fallthru
        _
    $region28: #{binary_cross_entropy_loss.1} parent=5 // pred_fallthru
      _
    %p217 = scmp.le.s32.totalorder 2, %s8
    // Predicated region
    $region33: #{binary_cross_entropy_loss.1} parent=5 // pred_check
      %p218 = pneg %p217
    $region34: #{binary_cross_entropy_loss.1} parent=5 // pred_check_branch
      %220 = sbr.rel (%p218) target = $region36
    $region35: #{binary_cross_entropy_loss.1} parent=5 // pred_region
      %s221 = ssub.s32 %s8, 2
      // Predicated region
      $region37: #{binary_cross_entropy_loss.1} parent=35 // pred_check
        %p222 = pneg %p89
      $region38: #{binary_cross_entropy_loss.1} parent=35 // pred_check_branch
        %224 = sbr.rel (%p222) target = $region40
      $region39: #{binary_cross_entropy_loss.1} parent=35 // pred_region
        %p225 = scmp.lt.s32.totalorder %s14, 3
        %s226 = scalar_select %p225, %s14, 3
        %s227 = scalar_lea.vmem %s2, %s226
      $region40: #{binary_cross_entropy_loss.1} parent=35 // pred_fallthru
        _
    $region36: #{binary_cross_entropy_loss.1} parent=5 // pred_fallthru
      _
  $region6: #{binary_cross_entropy_loss.1} parent=0 // loop_footer
    %s12 = sadd.s32 1, %s8
  $region7: #{binary_cross_entropy_loss.1} parent=0 // loop_footer_branch
    %7 = sbr.rel target = $region3
  $region8: #{binary_cross_entropy_loss.1} parent=0 // loop_exit
    _

</llo_original>
